<compile_context>
chip_gen: v6e
topology: v6e:2x2x1
jax: 0.10.0
libtpu: 0.0.40
codegen_flags: <defaults>
</compile_context>

<pallas_src>
import functools

import jax
import jax.numpy as jnp
from jax import lax
from jax.experimental import pallas as pl
from jax.experimental.pallas import tpu as pltpu

EPS = 1e-5


def _round_up(v, m):
    return (v + m - 1) // m * m


def _pick_tile_cols(N, L):
    """Columns per lane tile: whole samples per tile, preferring a 128-multiple
    near 1024 columns; falls back to the full N*L extent when no whole-sample
    tile is 128-aligned (e.g. the tiny test shapes)."""
    NL = N * L
    best = None
    for s in range(1, N + 1):
        if N % s:
            continue
        T = s * L
        if T % 128:
            continue
        score = abs(T - 1024)
        if best is None or score < best[1]:
            best = (T, score)
    if best is None:
        # TODO(synk): add a halo-exchanging lane tiling for shapes where no
        # whole-sample tile is 128-aligned instead of one big tile.
        return NL
    return best[0]


def _vmem_limit_bytes():
    """Generation-aware VMEM budget (leave headroom for double buffering)."""
    cap = 64 * 1024 * 1024
    try:
        info = pltpu.get_tpu_info()
        cap = int(getattr(info, "vmem_capacity_bytes", cap) or cap)
    except Exception:
        pass
    return int(min(cap * 3 // 4, 96 * 1024 * 1024))


def _tap_stack(a, L):
    """(C, T) f32 -> ((3C, T) bf16 im2col stack for k=3/pad=1, (C, T) bf16 center).

    Per-sample zero padding is applied via lane masks derived from iota % L;
    every tile holds whole samples, so no cross-tile halo is needed."""
    C, T = a.shape
    pos = lax.broadcasted_iota(jnp.int32, (1, T), 1) % L
    has_left = pos != 0
    has_right = pos != (L - 1)
    if T % 128 == 0:
        # bf16 first, then XLU lane rotation: no misaligned slice+concat copies.
        # The wrap column of the rotation is exactly the column the mask zeroes.
        ab = a.astype(jnp.bfloat16)
        zb = jnp.zeros_like(ab)
        left = jnp.where(has_left, pltpu.roll(ab, 1, 1), zb)        # col j <- a[:, j-1]
        right = jnp.where(has_right, pltpu.roll(ab, T - 1, 1), zb)  # col j <- a[:, j+1]
        return jnp.concatenate([left, ab, right], axis=0), ab
    # Small / non-128-aligned tiles (perf-irrelevant): slice+concat path.
    z = jnp.zeros((C, 1), a.dtype)
    left = jnp.where(has_left, jnp.concatenate([z, a[:, : T - 1]], axis=1), 0.0)
    right = jnp.where(has_right, jnp.concatenate([a[:, 1:], z], axis=1), 0.0)
    stack = jnp.concatenate([left, a, right], axis=0).astype(jnp.bfloat16)
    return stack, a.astype(jnp.bfloat16)


# ------------------------------ pass kernels ------------------------------
def _pass_a_kernel(L, use_1x1conv):
    """conv1 (+ optional 1x1 conv3); accumulate per-channel sum / sumsq."""
    def kernel(*refs):
        if use_1x1conv:
            (x_ref, w1_ref, w3_ref,
             raw1_ref, s1_ref, q1_ref, raw3_ref, s3_ref, q3_ref) = refs
        else:
            x_ref, w1_ref, raw1_ref, s1_ref, q1_ref = refs

        @pl.when(pl.program_id(0) == 0)
        def _():
            s1_ref[...] = jnp.zeros_like(s1_ref)
            q1_ref[...] = jnp.zeros_like(q1_ref)
            if use_1x1conv:
                s3_ref[...] = jnp.zeros_like(s3_ref)
                q3_ref[...] = jnp.zeros_like(q3_ref)

        xcol, xmid = _tap_stack(x_ref[...], L)                 # bf16
        raw1 = jnp.dot(w1_ref[...], xcol,
                       preferred_element_type=jnp.float32)     # (Cout_p, T) f32
        raw1_ref[...] = raw1
        s1_ref[...] += jnp.sum(raw1, axis=1, keepdims=True)
        q1_ref[...] += jnp.sum(raw1 * raw1, axis=1, keepdims=True)

        if use_1x1conv:
            # Shortcut 1x1 conv reuses the bf16 middle tap block (no re-cast).
            raw3 = jnp.dot(w3_ref[...], xmid,
                           preferred_element_type=jnp.float32)
            raw3_ref[...] = raw3
            s3_ref[...] += jnp.sum(raw3, axis=1, keepdims=True)
            q3_ref[...] += jnp.sum(raw3 * raw3, axis=1, keepdims=True)

    return kernel


def _pass_b_kernel(L):
    """Fused bn1-affine + ReLU + conv2; accumulate sum / sumsq of raw2."""
    def kernel(raw1_ref, sc1_ref, sh1_ref, w2_ref, raw2_ref, s2_ref, q2_ref):
        @pl.when(pl.program_id(0) == 0)
        def _():
            s2_ref[...] = jnp.zeros_like(s2_ref)
            q2_ref[...] = jnp.zeros_like(q2_ref)

        y1 = jnp.maximum(raw1_ref[...] * sc1_ref[...] + sh1_ref[...], 0.0)
        ycol, _ = _tap_stack(y1, L)
        raw2 = jnp.dot(w2_ref[...], ycol,
                       preferred_element_type=jnp.float32)
        raw2_ref[...] = raw2
        s2_ref[...] += jnp.sum(raw2, axis=1, keepdims=True)
        q2_ref[...] += jnp.sum(raw2 * raw2, axis=1, keepdims=True)

    return kernel


def _pass_c_kernel(use_1x1conv):
    """Fused bn2-affine + (bn3-affine | identity) shortcut + add + ReLU."""
    def kernel(*refs):
        if use_1x1conv:
            raw2_ref, sc2_ref, sh2_ref, raw3_ref, sc3_ref, sh3_ref, out_ref = refs
            shortcut = raw3_ref[...] * sc3_ref[...] + sh3_ref[...]
        else:
            raw2_ref, sc2_ref, sh2_ref, x_ref, out_ref = refs
            shortcut = x_ref[...]
        y2 = raw2_ref[...] * sc2_ref[...] + sh2_ref[...]
        out_ref[...] = jnp.maximum(y2 + shortcut, 0.0)

    return kernel


# ------------------------------ host wrapper ------------------------------
def _col(v, Cp):
    v = v.reshape(-1, 1).astype(jnp.float32)
    return jnp.pad(v, ((0, Cp - v.shape[0]), (0, 0)))


def _stack3(w, Cout_p, Cin_p):
    # (Cout, Cin, 3) -> (Cout_p, 3*Cin_p) bf16, tap-major blocks [k=0 | k=1 | k=2]
    w = jnp.pad(w.astype(jnp.float32),
                ((0, Cout_p - w.shape[0]), (0, Cin_p - w.shape[1]), (0, 0)))
    return jnp.concatenate([w[:, :, 0], w[:, :, 1], w[:, :, 2]],
                           axis=1).astype(jnp.bfloat16)


def _bn_affine(s, q, g, be, count):
    # Training-mode biased stats from sum / sum-of-squares (E[x^2] - mean^2).
    mean = s / count
    var = jnp.maximum(q / count - mean * mean, 0.0)
    scale = lax.rsqrt(var + EPS) * g
    shift = be - mean * scale
    return scale, shift


@functools.partial(jax.jit, static_argnums=(2,))
def residual_forward(x, p, use_1x1conv):
    N, Cin, L = x.shape
    Cout = p["w1"].shape[0]
    NL = N * L
    Cin_p, Cout_p = _round_up(Cin, 8), _round_up(Cout, 8)
    T = _pick_tile_cols(N, L)
    nt = NL // T
    vmem_limit = _vmem_limit_bytes()

    # Layout plumbing: lane-dense (Cin_p, N*L) slab, zero-padded channels.
    x2 = jnp.transpose(x.astype(jnp.float32), (1, 0, 2)).reshape(Cin, NL)
    x2 = jnp.pad(x2, ((0, Cin_p - Cin), (0, 0)))

    w1s = _stack3(p["w1"], Cout_p, Cin_p)
    w2s = _stack3(p["w2"], Cout_p, Cout_p)

    in_tile = lambda Cp: pl.BlockSpec((Cp, T), lambda t: (0, t))
    full = lambda arr: pl.BlockSpec(arr.shape, lambda t: (0, 0))
    col_spec = pl.BlockSpec((Cout_p, 1), lambda t: (0, 0))
    col_shape = jax.ShapeDtypeStruct((Cout_p, 1), jnp.float32)
    act_shape = jax.ShapeDtypeStruct((Cout_p, NL), jnp.float32)

    params_arb = pltpu.CompilerParams(dimension_semantics=("arbitrary",),
                                      vmem_limit_bytes=vmem_limit)
    params_par = pltpu.CompilerParams(dimension_semantics=("parallel",),
                                      vmem_limit_bytes=vmem_limit)

    # ----- pass A: conv1 (+ 1x1 conv3), per-channel sum / sumsq -----
    inputs_a = [x2, w1s]
    in_specs_a = [in_tile(Cin_p), full(w1s)]
    out_shape_a = [act_shape, col_shape, col_shape]
    out_specs_a = [in_tile(Cout_p), col_spec, col_spec]
    if use_1x1conv:
        w3s = jnp.pad(p["w3"][:, :, 0].astype(jnp.float32),
                      ((0, Cout_p - Cout), (0, Cin_p - Cin))).astype(jnp.bfloat16)
        inputs_a += [w3s]
        in_specs_a += [full(w3s)]
        out_shape_a += [act_shape, col_shape, col_shape]
        out_specs_a += [in_tile(Cout_p), col_spec, col_spec]

    res_a = pl.pallas_call(
        _pass_a_kernel(L, use_1x1conv),
        grid=(nt,),
        in_specs=in_specs_a,
        out_specs=tuple(out_specs_a),
        out_shape=tuple(out_shape_a),
        compiler_params=params_arb,
    )(*inputs_a)
    if use_1x1conv:
        raw1, s1, q1, raw3, s3, q3 = res_a
    else:
        raw1, s1, q1 = res_a

    sc1, sh1 = _bn_affine(s1, q1, _col(p["g1"], Cout_p), _col(p["be1"], Cout_p), NL)

    # ----- pass B: bn1 + ReLU + conv2, sum / sumsq of raw2 -----
    raw2, s2, q2 = pl.pallas_call(
        _pass_b_kernel(L),
        grid=(nt,),
        in_specs=[in_tile(Cout_p), col_spec, col_spec, full(w2s)],
        out_specs=(in_tile(Cout_p), col_spec, col_spec),
        out_shape=(act_shape, col_shape, col_shape),
        compiler_params=params_arb,
    )(raw1, sc1, sh1, w2s)

    sc2, sh2 = _bn_affine(s2, q2, _col(p["g2"], Cout_p), _col(p["be2"], Cout_p), NL)

    # ----- pass C: bn2 + shortcut + ReLU -----
    if use_1x1conv:
        sc3, sh3 = _bn_affine(s3, q3, _col(p["g3"], Cout_p), _col(p["be3"], Cout_p), NL)
        inputs_c = [raw2, sc2, sh2, raw3, sc3, sh3]
        in_specs_c = [in_tile(Cout_p), col_spec, col_spec,
                      in_tile(Cout_p), col_spec, col_spec]
    else:
        inputs_c = [raw2, sc2, sh2, x2]            # Cin_p == Cout_p here
        in_specs_c = [in_tile(Cout_p), col_spec, col_spec, in_tile(Cout_p)]

    out2 = pl.pallas_call(
        _pass_c_kernel(use_1x1conv),
        grid=(nt,),
        in_specs=in_specs_c,
        out_specs=in_tile(Cout_p),
        out_shape=jax.ShapeDtypeStruct((Cout_p, NL), jnp.float32),
        compiler_params=params_par,
    )(*inputs_c)

    # Drop pad channels, back to PyTorch layout (N, Cout, L).
    return jnp.transpose(out2[:Cout].reshape(Cout, N, L), (1, 0, 2))


# ---------------------------- pure-JAX reference ----------------------------
def ref_forward(x, p, use_1x1conv):
    def conv1d(x, w, b):
        L, K = x.shape[-1], w.shape[-1]
        pad = (K - 1) // 2
        xp = jnp.pad(x, ((0, 0), (0, 0), (pad, pad)))
        out = b[None, :, None]
        for k in range(K):
            out = out + jnp.einsum("oi,nil->nol", w[:, :, k], xp[:, :, k:k + L])
        return out

    def bn(y, g, be):
        m = jnp.mean(y, axis=(0, 2), keepdims=True)
        v = jnp.mean((y - m) ** 2, axis=(0, 2), keepdims=True)
        return (y - m) * lax.rsqrt(v + EPS) * g[None, :, None] + be[None, :, None]

    Y = jax.nn.relu(bn(conv1d(x, p["w1"], p["b1"]), p["g1"], p["be1"]))
    Y = bn(conv1d(Y, p["w2"], p["b2"]), p["g2"], p["be2"])
    X = bn(conv1d(x, p["w3"], p["b3"]), p["g3"], p["be3"]) if use_1x1conv else x
    return jax.nn.relu(Y + X)


def init_params(key, Cin, Cout, use_1x1conv):
    ks = jax.random.split(key, 12)
    p = {
        "w1": 0.2 * jax.random.normal(ks[0], (Cout, Cin, 3), jnp.float32),
        "b1": 0.1 * jax.random.normal(ks[1], (Cout,), jnp.float32),
        "w2": 0.2 * jax.random.normal(ks[2], (Cout, Cout, 3), jnp.float32),
        "b2": 0.1 * jax.random.normal(ks[3], (Cout,), jnp.float32),
        "g1": 1.0 + 0.1 * jax.random.normal(ks[4], (Cout,), jnp.float32),
        "be1": 0.1 * jax.random.normal(ks[5], (Cout,), jnp.float32),
        "g2": 1.0 + 0.1 * jax.random.normal(ks[6], (Cout,), jnp.float32),
        "be2": 0.1 * jax.random.normal(ks[7], (Cout,), jnp.float32),
    }
    if use_1x1conv:
        p.update({
            "w3": 0.2 * jax.random.normal(ks[8], (Cout, Cin, 1), jnp.float32),
            "b3": 0.1 * jax.random.normal(ks[9], (Cout,), jnp.float32),
            "g3": 1.0 + 0.1 * jax.random.normal(ks[10], (Cout,), jnp.float32),
            "be3": 0.1 * jax.random.normal(ks[11], (Cout,), jnp.float32),
        })
    return p


if __name__ == "__main__":
    key = jax.random.PRNGKey(0)
    kx1, kp1, kx2, kp2 = jax.random.split(key, 4)

    # Tolerance accounts for bf16 MXU inputs (f32 accumulation, f32 BN math).
    TOL = 5e-2

    # Case 1: projection shortcut (use_1x1conv=True), Cin != Cout
    N, Cin, Cout, L = 2, 4, 8, 16
    x1 = jax.random.normal(kx1, (N, Cin, L), jnp.float32)
    p1 = init_params(kp1, Cin, Cout, use_1x1conv=True)
    out1 = residual_forward(x1, p1, True)
    jax.block_until_ready(out1)
    ref1 = ref_forward(x1, p1, True)
    assert out1.shape == (N, Cout, L)
    assert jnp.allclose(out1, ref1, atol=TOL, rtol=TOL), float(
        jnp.max(jnp.abs(out1 - ref1)))

    # Case 2: identity shortcut (use_1x1conv=False), Cin == Cout
    N2, C2, L2 = 2, 8, 16
    x2 = jax.random.normal(kx2, (N2, C2, L2), jnp.float32)
    p2 = init_params(kp2, C2, C2, use_1x1conv=False)
    out2 = residual_forward(x2, p2, False)
    jax.block_until_ready(out2)
    ref2 = ref_forward(x2, p2, False)
    assert jnp.allclose(out2, ref2, atol=TOL, rtol=TOL), float(
        jnp.max(jnp.abs(out2 - ref2)))

    print("KERNEL_OK")
</pallas_src>

<mosaic_0001>
module attributes {stable_mosaic.version = 11 : i64} {
  func.func @kernel(%arg0: i32, %arg1: memref<8x32xf32, #tpu.memory_space<vmem>>, %arg2: memref<8x1xf32, #tpu.memory_space<vmem>>, %arg3: memref<8x1xf32, #tpu.memory_space<vmem>>, %arg4: memref<8x24xbf16, #tpu.memory_space<vmem>>, %arg5: memref<8x32xf32, #tpu.memory_space<vmem>>, %arg6: memref<8x1xf32, #tpu.memory_space<vmem>>, %arg7: memref<8x1xf32, #tpu.memory_space<vmem>>) attributes {dimension_semantics = [#tpu.dimension_semantics<arbitrary>], iteration_bounds = array<i64: 1>, scalar_prefetch = 0 : i64, scratch_operands = 0 : i64, tpu.core_type = #tpu.core_type<tc>, window_params = [{transform_indices = @transform_0, window_bounds = array<i64: 8, 32>}, {pipeline_mode = #tpu.pipeline_mode<synchronous>, transform_indices = @transform_1, window_bounds = array<i64: 8, 1>}, {pipeline_mode = #tpu.pipeline_mode<synchronous>, transform_indices = @transform_2, window_bounds = array<i64: 8, 1>}, {pipeline_mode = #tpu.pipeline_mode<synchronous>, transform_indices = @transform_3, window_bounds = array<i64: 8, 24>}, {transform_indices = @transform_4, window_bounds = array<i64: 8, 32>}, {pipeline_mode = #tpu.pipeline_mode<synchronous>, transform_indices = @transform_5, window_bounds = array<i64: 8, 1>}, {pipeline_mode = #tpu.pipeline_mode<synchronous>, transform_indices = @transform_6, window_bounds = array<i64: 8, 1>}]} {
    %c0_i32 = arith.constant 0 : i32
    %0 = arith.cmpi eq, %arg0, %c0_i32 : i32
    %1 = arith.extui %0 : i1 to i32
    %c0_i32_0 = arith.constant 0 : i32
    %2 = arith.cmpi ne, %1, %c0_i32_0 : i32
    scf.if %2 {
      %cst_29 = arith.constant 0.000000e+00 : f32
      %62 = vector.broadcast %cst_29 : f32 to vector<8x1xf32>
      %c0_30 = arith.constant 0 : index
      %c0_31 = arith.constant 0 : index
      %63 = vector.load %arg6[%c0_30, %c0_31] : memref<8x1xf32, #tpu.memory_space<vmem>>, vector<8x1xf32>
      tpu.vector_store %arg6[%c0_30, %c0_31], %62 {strides = array<i32>} : memref<8x1xf32, #tpu.memory_space<vmem>>, vector<8x1xf32>,
      %cst_32 = arith.constant 0.000000e+00 : f32
      %64 = vector.broadcast %cst_32 : f32 to vector<8x1xf32>
      %c0_33 = arith.constant 0 : index
      %c0_34 = arith.constant 0 : index
      %65 = vector.load %arg7[%c0_33, %c0_34] : memref<8x1xf32, #tpu.memory_space<vmem>>, vector<8x1xf32>
      tpu.vector_store %arg7[%c0_33, %c0_34], %64 {strides = array<i32>} : memref<8x1xf32, #tpu.memory_space<vmem>>, vector<8x1xf32>,
    } else {
    }
    %c0 = arith.constant 0 : index
    %c0_1 = arith.constant 0 : index
    %3 = vector.load %arg1[%c0, %c0_1] : memref<8x32xf32, #tpu.memory_space<vmem>>, vector<8x32xf32>
    %c0_2 = arith.constant 0 : index
    %c0_3 = arith.constant 0 : index
    %4 = vector.load %arg2[%c0_2, %c0_3] : memref<8x1xf32, #tpu.memory_space<vmem>>, vector<8x1xf32>
    %5 = vector.broadcast %4 : vector<8x1xf32> to vector<8x32xf32>
    %6 = arith.mulf %3, %5 : vector<8x32xf32>
    %c0_4 = arith.constant 0 : index
    %c0_5 = arith.constant 0 : index
    %7 = vector.load %arg3[%c0_4, %c0_5] : memref<8x1xf32, #tpu.memory_space<vmem>>, vector<8x1xf32>
    %8 = vector.broadcast %7 : vector<8x1xf32> to vector<8x32xf32>
    %9 = arith.addf %6, %8 : vector<8x32xf32>
    %cst = arith.constant 0.000000e+00 : f32
    %10 = vector.broadcast %cst : f32 to vector<8x32xf32>
    %11 = arith.maximumf %9, %10 : vector<8x32xf32>
    %12 = tpu.iota {dimensions = array<i32: 1>} : vector<1x32xi32>
    %c16_i32 = arith.constant 16 : i32
    %c0_i32_6 = arith.constant 0 : i32
    %13 = arith.cmpi eq, %c16_i32, %c0_i32_6 : i32
    %c1_i32 = arith.constant 1 : i32
    %14 = arith.select %13, %c1_i32, %c16_i32 : i32
    %15 = vector.broadcast %14 : i32 to vector<1x32xi32>
    %16 = arith.remsi %12, %15 : vector<1x32xi32>
    %c0_i32_7 = arith.constant 0 : i32
    %17 = vector.broadcast %c0_i32_7 : i32 to vector<1x32xi32>
    %18 = arith.cmpi ne, %16, %17 : vector<1x32xi32>
    %c0_i32_8 = arith.constant 0 : i32
    %19 = vector.broadcast %c0_i32_8 : i32 to vector<1x32xi32>
    %20 = arith.cmpi slt, %16, %19 : vector<1x32xi32>
    %c0_i32_9 = arith.constant 0 : i32
    %21 = arith.cmpi slt, %14, %c0_i32_9 : i32
    %22 = vector.broadcast %21 : i1 to vector<1x32xi1>
    %23 = vector.broadcast %22 : vector<1x32xi1> to vector<1x32xi1>
    %24 = arith.xori %20, %23 : vector<1x32xi1>
    %25 = arith.andi %24, %18 : vector<1x32xi1>
    %26 = vector.broadcast %14 : i32 to vector<1x32xi32>
    %27 = arith.addi %16, %26 : vector<1x32xi32>
    %28 = arith.select %25, %27, %16 : vector<1x32xi1>, vector<1x32xi32>
    %c0_i32_10 = arith.constant 0 : i32
    %29 = vector.broadcast %c0_i32_10 : i32 to vector<1x32xi32>
    %30 = arith.cmpi ne, %28, %29 : vector<1x32xi32>
    %c15_i32 = arith.constant 15 : i32
    %31 = vector.broadcast %c15_i32 : i32 to vector<1x32xi32>
    %32 = arith.cmpi ne, %28, %31 : vector<1x32xi32>
    %cst_11 = arith.constant 0.000000e+00 : f32
    %33 = vector.broadcast %cst_11 : f32 to vector<8x1xf32>
    %34 = vector.extract_strided_slice %11 {offsets = [0, 0], sizes = [8, 31], strides = [1, 1]} : vector<8x32xf32> to vector<8x31xf32>
    %35 = tpu.concatenate %33, %34 in 1 : vector<8x1xf32>, vector<8x31xf32> -> vector<8x32xf32>
    %cst_12 = arith.constant 0.000000e+00 : f32
    %36 = vector.shape_cast %30 : vector<1x32xi1> to vector<1x32xi1>
    %37 = vector.broadcast %36 : vector<1x32xi1> to vector<8x32xi1>
    %38 = vector.broadcast %cst_12 : f32 to vector<8x32xf32>
    %39 = arith.select %37, %35, %38 : vector<8x32xi1>, vector<8x32xf32>
    %40 = vector.extract_strided_slice %11 {offsets = [0, 1], sizes = [8, 31], strides = [1, 1]} : vector<8x32xf32> to vector<8x31xf32>
    %41 = tpu.concatenate %40, %33 in 1 : vector<8x31xf32>, vector<8x1xf32> -> vector<8x32xf32>
    %cst_13 = arith.constant 0.000000e+00 : f32
    %42 = vector.shape_cast %32 : vector<1x32xi1> to vector<1x32xi1>
    %43 = vector.broadcast %42 : vector<1x32xi1> to vector<8x32xi1>
    %44 = vector.broadcast %cst_13 : f32 to vector<8x32xf32>
    %45 = arith.select %43, %41, %44 : vector<8x32xi1>, vector<8x32xf32>
    %46 = tpu.concatenate %39, %11, %45 in 0 : vector<8x32xf32>, vector<8x32xf32>, vector<8x32xf32> -> vector<24x32xf32>
    %47 = arith.truncf %46 : vector<24x32xf32> to vector<24x32xbf16>
    %c0_14 = arith.constant 0 : index
    %c0_15 = arith.constant 0 : index
    %48 = vector.load %arg4[%c0_14, %c0_15] : memref<8x24xbf16, #tpu.memory_space<vmem>>, vector<8x24xbf16>
    %cst_16 = arith.constant dense<0.000000e+00> : vector<8x32xf32>
    %49 = tpu.matmul %48, %47, %cst_16 {dimension_numbers = #tpu.dot_dimension_numbers<[1], [0], [0], [1], [0, 0, 1, 1], [], []>} : vector<8x24xbf16>, vector<24x32xbf16>, vector<8x32xf32> -> vector<8x32xf32>
    %c0_17 = arith.constant 0 : index
    %c0_18 = arith.constant 0 : index
    %50 = vector.load %arg5[%c0_17, %c0_18] : memref<8x32xf32, #tpu.memory_space<vmem>>, vector<8x32xf32>
    tpu.vector_store %arg5[%c0_17, %c0_18], %49 {strides = array<i32>} : memref<8x32xf32, #tpu.memory_space<vmem>>, vector<8x32xf32>,
    %c0_19 = arith.constant 0 : index
    %c0_20 = arith.constant 0 : index
    %51 = vector.load %arg6[%c0_19, %c0_20] : memref<8x1xf32, #tpu.memory_space<vmem>>, vector<8x1xf32>
    %cst_21 = arith.constant dense<0.000000e+00> : vector<8xf32>
    %52 = vector.multi_reduction <add>, %49, %cst_21 [1] : vector<8x32xf32> to vector<8xf32>
    %53 = vector.shape_cast %52 : vector<8xf32> to vector<8x1xf32>
    %54 = arith.addf %51, %53 : vector<8x1xf32>
    %c0_22 = arith.constant 0 : index
    %c0_23 = arith.constant 0 : index
    %55 = vector.load %arg6[%c0_22, %c0_23] : memref<8x1xf32, #tpu.memory_space<vmem>>, vector<8x1xf32>
    tpu.vector_store %arg6[%c0_22, %c0_23], %54 {strides = array<i32>} : memref<8x1xf32, #tpu.memory_space<vmem>>, vector<8x1xf32>,
    %c0_24 = arith.constant 0 : index
    %c0_25 = arith.constant 0 : index
    %56 = vector.load %arg7[%c0_24, %c0_25] : memref<8x1xf32, #tpu.memory_space<vmem>>, vector<8x1xf32>
    %57 = arith.mulf %49, %49 : vector<8x32xf32>
    %cst_26 = arith.constant dense<0.000000e+00> : vector<8xf32>
    %58 = vector.multi_reduction <add>, %57, %cst_26 [1] : vector<8x32xf32> to vector<8xf32>
    %59 = vector.shape_cast %58 : vector<8xf32> to vector<8x1xf32>
    %60 = arith.addf %56, %59 : vector<8x1xf32>
    %c0_27 = arith.constant 0 : index
    %c0_28 = arith.constant 0 : index
    %61 = vector.load %arg7[%c0_27, %c0_28] : memref<8x1xf32, #tpu.memory_space<vmem>>, vector<8x1xf32>
    tpu.vector_store %arg7[%c0_27, %c0_28], %60 {strides = array<i32>} : memref<8x1xf32, #tpu.memory_space<vmem>>, vector<8x1xf32>,
    return
  }
  func.func @transform_0(%arg0: i32) -> (i32, i32) {
    %c0_i32 = arith.constant 0 : i32
    %c0_i32_0 = arith.constant 0 : i32
    return %c0_i32, %arg0 : i32, i32
  }
  func.func @transform_1(%arg0: i32) -> (i32, i32) {
    %c0_i32 = arith.constant 0 : i32
    %c0_i32_0 = arith.constant 0 : i32
    %c0_i32_1 = arith.constant 0 : i32
    return %c0_i32, %c0_i32_0 : i32, i32
  }
  func.func @transform_2(%arg0: i32) -> (i32, i32) {
    %c0_i32 = arith.constant 0 : i32
    %c0_i32_0 = arith.constant 0 : i32
    %c0_i32_1 = arith.constant 0 : i32
    return %c0_i32, %c0_i32_0 : i32, i32
  }
  func.func @transform_3(%arg0: i32) -> (i32, i32) {
    %c0_i32 = arith.constant 0 : i32
    %c0_i32_0 = arith.constant 0 : i32
    %c0_i32_1 = arith.constant 0 : i32
    return %c0_i32, %c0_i32_0 : i32, i32
  }
  func.func @transform_4(%arg0: i32) -> (i32, i32) {
    %c0_i32 = arith.constant 0 : i32
    %c0_i32_0 = arith.constant 0 : i32
    return %c0_i32, %arg0 : i32, i32
  }
  func.func @transform_5(%arg0: i32) -> (i32, i32) {
    %c0_i32 = arith.constant 0 : i32
    %c0_i32_0 = arith.constant 0 : i32
    %c0_i32_1 = arith.constant 0 : i32
    return %c0_i32, %c0_i32_0 : i32, i32
  }
  func.func @transform_6(%arg0: i32) -> (i32, i32) {
    %c0_i32 = arith.constant 0 : i32
    %c0_i32_0 = arith.constant 0 : i32
    %c0_i32_1 = arith.constant 0 : i32
    return %c0_i32, %c0_i32_0 : i32, i32
  }
}

module attributes {stable_mosaic.version = 11 : i64} {
  func.func @kernel(%arg0: i32, %arg1: memref<8x32xf32, #tpu.memory_space<vmem>>, %arg2: memref<8x24xbf16, #tpu.memory_space<vmem>>, %arg3: memref<8x8xbf16, #tpu.memory_space<vmem>>, %arg4: memref<8x32xf32, #tpu.memory_space<vmem>>, %arg5: memref<8x1xf32, #tpu.memory_space<vmem>>, %arg6: memref<8x1xf32, #tpu.memory_space<vmem>>, %arg7: memref<8x32xf32, #tpu.memory_space<vmem>>, %arg8: memref<8x1xf32, #tpu.memory_space<vmem>>, %arg9: memref<8x1xf32, #tpu.memory_space<vmem>>) attributes {dimension_semantics = [#tpu.dimension_semantics<arbitrary>], iteration_bounds = array<i64: 1>, scalar_prefetch = 0 : i64, scratch_operands = 0 : i64, tpu.core_type = #tpu.core_type<tc>, window_params = [{transform_indices = @transform_0, window_bounds = array<i64: 8, 32>}, {pipeline_mode = #tpu.pipeline_mode<synchronous>, transform_indices = @transform_1, window_bounds = array<i64: 8, 24>}, {pipeline_mode = #tpu.pipeline_mode<synchronous>, transform_indices = @transform_2, window_bounds = array<i64: 8, 8>}, {transform_indices = @transform_3, window_bounds = array<i64: 8, 32>}, {pipeline_mode = #tpu.pipeline_mode<synchronous>, transform_indices = @transform_4, window_bounds = array<i64: 8, 1>}, {pipeline_mode = #tpu.pipeline_mode<synchronous>, transform_indices = @transform_5, window_bounds = array<i64: 8, 1>}, {transform_indices = @transform_6, window_bounds = array<i64: 8, 32>}, {pipeline_mode = #tpu.pipeline_mode<synchronous>, transform_indices = @transform_7, window_bounds = array<i64: 8, 1>}, {pipeline_mode = #tpu.pipeline_mode<synchronous>, transform_indices = @transform_8, window_bounds = array<i64: 8, 1>}]} {
    %c0_i32 = arith.constant 0 : i32
    %0 = arith.cmpi eq, %arg0, %c0_i32 : i32
    %1 = arith.extui %0 : i1 to i32
    %c0_i32_0 = arith.constant 0 : i32
    %2 = arith.cmpi ne, %1, %c0_i32_0 : i32
    scf.if %2 {
      %cst_39 = arith.constant 0.000000e+00 : f32
      %69 = vector.broadcast %cst_39 : f32 to vector<8x1xf32>
      %c0_40 = arith.constant 0 : index
      %c0_41 = arith.constant 0 : index
      %70 = vector.load %arg5[%c0_40, %c0_41] : memref<8x1xf32, #tpu.memory_space<vmem>>, vector<8x1xf32>
      tpu.vector_store %arg5[%c0_40, %c0_41], %69 {strides = array<i32>} : memref<8x1xf32, #tpu.memory_space<vmem>>, vector<8x1xf32>,
      %cst_42 = arith.constant 0.000000e+00 : f32
      %71 = vector.broadcast %cst_42 : f32 to vector<8x1xf32>
      %c0_43 = arith.constant 0 : index
      %c0_44 = arith.constant 0 : index
      %72 = vector.load %arg6[%c0_43, %c0_44] : memref<8x1xf32, #tpu.memory_space<vmem>>, vector<8x1xf32>
      tpu.vector_store %arg6[%c0_43, %c0_44], %71 {strides = array<i32>} : memref<8x1xf32, #tpu.memory_space<vmem>>, vector<8x1xf32>,
      %cst_45 = arith.constant 0.000000e+00 : f32
      %73 = vector.broadcast %cst_45 : f32 to vector<8x1xf32>
      %c0_46 = arith.constant 0 : index
      %c0_47 = arith.constant 0 : index
      %74 = vector.load %arg8[%c0_46, %c0_47] : memref<8x1xf32, #tpu.memory_space<vmem>>, vector<8x1xf32>
      tpu.vector_store %arg8[%c0_46, %c0_47], %73 {strides = array<i32>} : memref<8x1xf32, #tpu.memory_space<vmem>>, vector<8x1xf32>,
      %cst_48 = arith.constant 0.000000e+00 : f32
      %75 = vector.broadcast %cst_48 : f32 to vector<8x1xf32>
      %c0_49 = arith.constant 0 : index
      %c0_50 = arith.constant 0 : index
      %76 = vector.load %arg9[%c0_49, %c0_50] : memref<8x1xf32, #tpu.memory_space<vmem>>, vector<8x1xf32>
      tpu.vector_store %arg9[%c0_49, %c0_50], %75 {strides = array<i32>} : memref<8x1xf32, #tpu.memory_space<vmem>>, vector<8x1xf32>,
    } else {
    }
    %c0 = arith.constant 0 : index
    %c0_1 = arith.constant 0 : index
    %3 = vector.load %arg1[%c0, %c0_1] : memref<8x32xf32, #tpu.memory_space<vmem>>, vector<8x32xf32>
    %4 = tpu.iota {dimensions = array<i32: 1>} : vector<1x32xi32>
    %c16_i32 = arith.constant 16 : i32
    %c0_i32_2 = arith.constant 0 : i32
    %5 = arith.cmpi eq, %c16_i32, %c0_i32_2 : i32
    %c1_i32 = arith.constant 1 : i32
    %6 = arith.select %5, %c1_i32, %c16_i32 : i32
    %7 = vector.broadcast %6 : i32 to vector<1x32xi32>
    %8 = arith.remsi %4, %7 : vector<1x32xi32>
    %c0_i32_3 = arith.constant 0 : i32
    %9 = vector.broadcast %c0_i32_3 : i32 to vector<1x32xi32>
    %10 = arith.cmpi ne, %8, %9 : vector<1x32xi32>
    %c0_i32_4 = arith.constant 0 : i32
    %11 = vector.broadcast %c0_i32_4 : i32 to vector<1x32xi32>
    %12 = arith.cmpi slt, %8, %11 : vector<1x32xi32>
    %c0_i32_5 = arith.constant 0 : i32
    %13 = arith.cmpi slt, %6, %c0_i32_5 : i32
    %14 = vector.broadcast %13 : i1 to vector<1x32xi1>
    %15 = vector.broadcast %14 : vector<1x32xi1> to vector<1x32xi1>
    %16 = arith.xori %12, %15 : vector<1x32xi1>
    %17 = arith.andi %16, %10 : vector<1x32xi1>
    %18 = vector.broadcast %6 : i32 to vector<1x32xi32>
    %19 = arith.addi %8, %18 : vector<1x32xi32>
    %20 = arith.select %17, %19, %8 : vector<1x32xi1>, vector<1x32xi32>
    %c0_i32_6 = arith.constant 0 : i32
    %21 = vector.broadcast %c0_i32_6 : i32 to vector<1x32xi32>
    %22 = arith.cmpi ne, %20, %21 : vector<1x32xi32>
    %c15_i32 = arith.constant 15 : i32
    %23 = vector.broadcast %c15_i32 : i32 to vector<1x32xi32>
    %24 = arith.cmpi ne, %20, %23 : vector<1x32xi32>
    %cst = arith.constant 0.000000e+00 : f32
    %25 = vector.broadcast %cst : f32 to vector<8x1xf32>
    %26 = vector.extract_strided_slice %3 {offsets = [0, 0], sizes = [8, 31], strides = [1, 1]} : vector<8x32xf32> to vector<8x31xf32>
    %27 = tpu.concatenate %25, %26 in 1 : vector<8x1xf32>, vector<8x31xf32> -> vector<8x32xf32>
    %cst_7 = arith.constant 0.000000e+00 : f32
    %28 = vector.shape_cast %22 : vector<1x32xi1> to vector<1x32xi1>
    %29 = vector.broadcast %28 : vector<1x32xi1> to vector<8x32xi1>
    %30 = vector.broadcast %cst_7 : f32 to vector<8x32xf32>
    %31 = arith.select %29, %27, %30 : vector<8x32xi1>, vector<8x32xf32>
    %32 = vector.extract_strided_slice %3 {offsets = [0, 1], sizes = [8, 31], strides = [1, 1]} : vector<8x32xf32> to vector<8x31xf32>
    %33 = tpu.concatenate %32, %25 in 1 : vector<8x31xf32>, vector<8x1xf32> -> vector<8x32xf32>
    %cst_8 = arith.constant 0.000000e+00 : f32
    %34 = vector.shape_cast %24 : vector<1x32xi1> to vector<1x32xi1>
    %35 = vector.broadcast %34 : vector<1x32xi1> to vector<8x32xi1>
    %36 = vector.broadcast %cst_8 : f32 to vector<8x32xf32>
    %37 = arith.select %35, %33, %36 : vector<8x32xi1>, vector<8x32xf32>
    %38 = tpu.concatenate %31, %3, %37 in 0 : vector<8x32xf32>, vector<8x32xf32>, vector<8x32xf32> -> vector<24x32xf32>
    %39 = arith.truncf %38 : vector<24x32xf32> to vector<24x32xbf16>
    %40 = arith.truncf %3 : vector<8x32xf32> to vector<8x32xbf16>
    %c0_9 = arith.constant 0 : index
    %c0_10 = arith.constant 0 : index
    %41 = vector.load %arg2[%c0_9, %c0_10] : memref<8x24xbf16, #tpu.memory_space<vmem>>, vector<8x24xbf16>
    %cst_11 = arith.constant dense<0.000000e+00> : vector<8x32xf32>
    %42 = tpu.matmul %41, %39, %cst_11 {dimension_numbers = #tpu.dot_dimension_numbers<[1], [0], [0], [1], [0, 0, 1, 1], [], []>} : vector<8x24xbf16>, vector<24x32xbf16>, vector<8x32xf32> -> vector<8x32xf32>
    %c0_12 = arith.constant 0 : index
    %c0_13 = arith.constant 0 : index
    %43 = vector.load %arg4[%c0_12, %c0_13] : memref<8x32xf32, #tpu.memory_space<vmem>>, vector<8x32xf32>
    tpu.vector_store %arg4[%c0_12, %c0_13], %42 {strides = array<i32>} : memref<8x32xf32, #tpu.memory_space<vmem>>, vector<8x32xf32>,
    %c0_14 = arith.constant 0 : index
    %c0_15 = arith.constant 0 : index
    %44 = vector.load %arg5[%c0_14, %c0_15] : memref<8x1xf32, #tpu.memory_space<vmem>>, vector<8x1xf32>
    %cst_16 = arith.constant dense<0.000000e+00> : vector<8xf32>
    %45 = vector.multi_reduction <add>, %42, %cst_16 [1] : vector<8x32xf32> to vector<8xf32>
    %46 = vector.shape_cast %45 : vector<8xf32> to vector<8x1xf32>
    %47 = arith.addf %44, %46 : vector<8x1xf32>
    %c0_17 = arith.constant 0 : index
    %c0_18 = arith.constant 0 : index
    %48 = vector.load %arg5[%c0_17, %c0_18] : memref<8x1xf32, #tpu.memory_space<vmem>>, vector<8x1xf32>
    tpu.vector_store %arg5[%c0_17, %c0_18], %47 {strides = array<i32>} : memref<8x1xf32, #tpu.memory_space<vmem>>, vector<8x1xf32>,
    %c0_19 = arith.constant 0 : index
    %c0_20 = arith.constant 0 : index
    %49 = vector.load %arg6[%c0_19, %c0_20] : memref<8x1xf32, #tpu.memory_space<vmem>>, vector<8x1xf32>
    %50 = arith.mulf %42, %42 : vector<8x32xf32>
    %cst_21 = arith.constant dense<0.000000e+00> : vector<8xf32>
    %51 = vector.multi_reduction <add>, %50, %cst_21 [1] : vector<8x32xf32> to vector<8xf32>
    %52 = vector.shape_cast %51 : vector<8xf32> to vector<8x1xf32>
    %53 = arith.addf %49, %52 : vector<8x1xf32>
    %c0_22 = arith.constant 0 : index
    %c0_23 = arith.constant 0 : index
    %54 = vector.load %arg6[%c0_22, %c0_23] : memref<8x1xf32, #tpu.memory_space<vmem>>, vector<8x1xf32>
    tpu.vector_store %arg6[%c0_22, %c0_23], %53 {strides = array<i32>} : memref<8x1xf32, #tpu.memory_space<vmem>>, vector<8x1xf32>,
    %c0_24 = arith.constant 0 : index
    %c0_25 = arith.constant 0 : index
    %55 = vector.load %arg3[%c0_24, %c0_25] : memref<8x8xbf16, #tpu.memory_space<vmem>>, vector<8x8xbf16>
    %cst_26 = arith.constant dense<0.000000e+00> : vector<8x32xf32>
    %56 = tpu.matmul %55, %40, %cst_26 {dimension_numbers = #tpu.dot_dimension_numbers<[1], [0], [0], [1], [0, 0, 1, 1], [], []>} : vector<8x8xbf16>, vector<8x32xbf16>, vector<8x32xf32> -> vector<8x32xf32>
    %c0_27 = arith.constant 0 : index
    %c0_28 = arith.constant 0 : index
    %57 = vector.load %arg7[%c0_27, %c0_28] : memref<8x32xf32, #tpu.memory_space<vmem>>, vector<8x32xf32>
    tpu.vector_store %arg7[%c0_27, %c0_28], %56 {strides = array<i32>} : memref<8x32xf32, #tpu.memory_space<vmem>>, vector<8x32xf32>,
    %c0_29 = arith.constant 0 : index
    %c0_30 = arith.constant 0 : index
    %58 = vector.load %arg8[%c0_29, %c0_30] : memref<8x1xf32, #tpu.memory_space<vmem>>, vector<8x1xf32>
    %cst_31 = arith.constant dense<0.000000e+00> : vector<8xf32>
    %59 = vector.multi_reduction <add>, %56, %cst_31 [1] : vector<8x32xf32> to vector<8xf32>
    %60 = vector.shape_cast %59 : vector<8xf32> to vector<8x1xf32>
    %61 = arith.addf %58, %60 : vector<8x1xf32>
    %c0_32 = arith.constant 0 : index
    %c0_33 = arith.constant 0 : index
    %62 = vector.load %arg8[%c0_32, %c0_33] : memref<8x1xf32, #tpu.memory_space<vmem>>, vector<8x1xf32>
    tpu.vector_store %arg8[%c0_32, %c0_33], %61 {strides = array<i32>} : memref<8x1xf32, #tpu.memory_space<vmem>>, vector<8x1xf32>,
    %c0_34 = arith.constant 0 : index
    %c0_35 = arith.constant 0 : index
    %63 = vector.load %arg9[%c0_34, %c0_35] : memref<8x1xf32, #tpu.memory_space<vmem>>, vector<8x1xf32>
    %64 = arith.mulf %56, %56 : vector<8x32xf32>
    %cst_36 = arith.constant dense<0.000000e+00> : vector<8xf32>
    %65 = vector.multi_reduction <add>, %64, %cst_36 [1] : vector<8x32xf32> to vector<8xf32>
    %66 = vector.shape_cast %65 : vector<8xf32> to vector<8x1xf32>
    %67 = arith.addf %63, %66 : vector<8x1xf32>
    %c0_37 = arith.constant 0 : index
    %c0_38 = arith.constant 0 : index
    %68 = vector.load %arg9[%c0_37, %c0_38] : memref<8x1xf32, #tpu.memory_space<vmem>>, vector<8x1xf32>
    tpu.vector_store %arg9[%c0_37, %c0_38], %67 {strides = array<i32>} : memref<8x1xf32, #tpu.memory_space<vmem>>, vector<8x1xf32>,
    return
  }
  func.func @transform_0(%arg0: i32) -> (i32, i32) {
    %c0_i32 = arith.constant 0 : i32
    %c0_i32_0 = arith.constant 0 : i32
    return %c0_i32, %arg0 : i32, i32
  }
  func.func @transform_1(%arg0: i32) -> (i32, i32) {
    %c0_i32 = arith.constant 0 : i32
    %c0_i32_0 = arith.constant 0 : i32
    %c0_i32_1 = arith.constant 0 : i32
    return %c0_i32, %c0_i32_0 : i32, i32
  }
  func.func @transform_2(%arg0: i32) -> (i32, i32) {
    %c0_i32 = arith.constant 0 : i32
    %c0_i32_0 = arith.constant 0 : i32
    %c0_i32_1 = arith.constant 0 : i32
    return %c0_i32, %c0_i32_0 : i32, i32
  }
  func.func @transform_3(%arg0: i32) -> (i32, i32) {
    %c0_i32 = arith.constant 0 : i32
    %c0_i32_0 = arith.constant 0 : i32
    return %c0_i32, %arg0 : i32, i32
  }
  func.func @transform_4(%arg0: i32) -> (i32, i32) {
    %c0_i32 = arith.constant 0 : i32
    %c0_i32_0 = arith.constant 0 : i32
    %c0_i32_1 = arith.constant 0 : i32
    return %c0_i32, %c0_i32_0 : i32, i32
  }
  func.func @transform_5(%arg0: i32) -> (i32, i32) {
    %c0_i32 = arith.constant 0 : i32
    %c0_i32_0 = arith.constant 0 : i32
    %c0_i32_1 = arith.constant 0 : i32
    return %c0_i32, %c0_i32_0 : i32, i32
  }
  func.func @transform_6(%arg0: i32) -> (i32, i32) {
    %c0_i32 = arith.constant 0 : i32
    %c0_i32_0 = arith.constant 0 : i32
    return %c0_i32, %arg0 : i32, i32
  }
  func.func @transform_7(%arg0: i32) -> (i32, i32) {
    %c0_i32 = arith.constant 0 : i32
    %c0_i32_0 = arith.constant 0 : i32
    %c0_i32_1 = arith.constant 0 : i32
    return %c0_i32, %c0_i32_0 : i32, i32
  }
  func.func @transform_8(%arg0: i32) -> (i32, i32) {
    %c0_i32 = arith.constant 0 : i32
    %c0_i32_0 = arith.constant 0 : i32
    %c0_i32_1 = arith.constant 0 : i32
    return %c0_i32, %c0_i32_0 : i32, i32
  }
}

module attributes {stable_mosaic.version = 11 : i64} {
  func.func @kernel(%arg0: i32, %arg1: memref<8x32xf32, #tpu.memory_space<vmem>>, %arg2: memref<8x1xf32, #tpu.memory_space<vmem>>, %arg3: memref<8x1xf32, #tpu.memory_space<vmem>>, %arg4: memref<8x32xf32, #tpu.memory_space<vmem>>, %arg5: memref<8x1xf32, #tpu.memory_space<vmem>>, %arg6: memref<8x1xf32, #tpu.memory_space<vmem>>, %arg7: memref<8x32xf32, #tpu.memory_space<vmem>>) attributes {dimension_semantics = [#tpu.dimension_semantics<parallel>], iteration_bounds = array<i64: 1>, scalar_prefetch = 0 : i64, scratch_operands = 0 : i64, tpu.core_type = #tpu.core_type<tc>, window_params = [{transform_indices = @transform_0, window_bounds = array<i64: 8, 32>}, {pipeline_mode = #tpu.pipeline_mode<synchronous>, transform_indices = @transform_1, window_bounds = array<i64: 8, 1>}, {pipeline_mode = #tpu.pipeline_mode<synchronous>, transform_indices = @transform_2, window_bounds = array<i64: 8, 1>}, {transform_indices = @transform_3, window_bounds = array<i64: 8, 32>}, {pipeline_mode = #tpu.pipeline_mode<synchronous>, transform_indices = @transform_4, window_bounds = array<i64: 8, 1>}, {pipeline_mode = #tpu.pipeline_mode<synchronous>, transform_indices = @transform_5, window_bounds = array<i64: 8, 1>}, {transform_indices = @transform_6, window_bounds = array<i64: 8, 32>}]} {
    %c0 = arith.constant 0 : index
    %c0_0 = arith.constant 0 : index
    %0 = vector.load %arg4[%c0, %c0_0] : memref<8x32xf32, #tpu.memory_space<vmem>>, vector<8x32xf32>
    %c0_1 = arith.constant 0 : index
    %c0_2 = arith.constant 0 : index
    %1 = vector.load %arg5[%c0_1, %c0_2] : memref<8x1xf32, #tpu.memory_space<vmem>>, vector<8x1xf32>
    %2 = vector.broadcast %1 : vector<8x1xf32> to vector<8x32xf32>
    %3 = arith.mulf %0, %2 : vector<8x32xf32>
    %c0_3 = arith.constant 0 : index
    %c0_4 = arith.constant 0 : index
    %4 = vector.load %arg6[%c0_3, %c0_4] : memref<8x1xf32, #tpu.memory_space<vmem>>, vector<8x1xf32>
    %5 = vector.broadcast %4 : vector<8x1xf32> to vector<8x32xf32>
    %6 = arith.addf %3, %5 : vector<8x32xf32>
    %c0_5 = arith.constant 0 : index
    %c0_6 = arith.constant 0 : index
    %7 = vector.load %arg1[%c0_5, %c0_6] : memref<8x32xf32, #tpu.memory_space<vmem>>, vector<8x32xf32>
    %c0_7 = arith.constant 0 : index
    %c0_8 = arith.constant 0 : index
    %8 = vector.load %arg2[%c0_7, %c0_8] : memref<8x1xf32, #tpu.memory_space<vmem>>, vector<8x1xf32>
    %9 = vector.broadcast %8 : vector<8x1xf32> to vector<8x32xf32>
    %10 = arith.mulf %7, %9 : vector<8x32xf32>
    %c0_9 = arith.constant 0 : index
    %c0_10 = arith.constant 0 : index
    %11 = vector.load %arg3[%c0_9, %c0_10] : memref<8x1xf32, #tpu.memory_space<vmem>>, vector<8x1xf32>
    %12 = vector.broadcast %11 : vector<8x1xf32> to vector<8x32xf32>
    %13 = arith.addf %10, %12 : vector<8x32xf32>
    %14 = arith.addf %13, %6 : vector<8x32xf32>
    %cst = arith.constant 0.000000e+00 : f32
    %15 = vector.broadcast %cst : f32 to vector<8x32xf32>
    %16 = arith.maximumf %14, %15 : vector<8x32xf32>
    %c0_11 = arith.constant 0 : index
    %c0_12 = arith.constant 0 : index
    %17 = vector.load %arg7[%c0_11, %c0_12] : memref<8x32xf32, #tpu.memory_space<vmem>>, vector<8x32xf32>
    tpu.vector_store %arg7[%c0_11, %c0_12], %16 {strides = array<i32>} : memref<8x32xf32, #tpu.memory_space<vmem>>, vector<8x32xf32>,
    return
  }
  func.func @transform_0(%arg0: i32) -> (i32, i32) {
    %c0_i32 = arith.constant 0 : i32
    %c0_i32_0 = arith.constant 0 : i32
    return %c0_i32, %arg0 : i32, i32
  }
  func.func @transform_1(%arg0: i32) -> (i32, i32) {
    %c0_i32 = arith.constant 0 : i32
    %c0_i32_0 = arith.constant 0 : i32
    %c0_i32_1 = arith.constant 0 : i32
    return %c0_i32, %c0_i32_0 : i32, i32
  }
  func.func @transform_2(%arg0: i32) -> (i32, i32) {
    %c0_i32 = arith.constant 0 : i32
    %c0_i32_0 = arith.constant 0 : i32
    %c0_i32_1 = arith.constant 0 : i32
    return %c0_i32, %c0_i32_0 : i32, i32
  }
  func.func @transform_3(%arg0: i32) -> (i32, i32) {
    %c0_i32 = arith.constant 0 : i32
    %c0_i32_0 = arith.constant 0 : i32
    return %c0_i32, %arg0 : i32, i32
  }
  func.func @transform_4(%arg0: i32) -> (i32, i32) {
    %c0_i32 = arith.constant 0 : i32
    %c0_i32_0 = arith.constant 0 : i32
    %c0_i32_1 = arith.constant 0 : i32
    return %c0_i32, %c0_i32_0 : i32, i32
  }
  func.func @transform_5(%arg0: i32) -> (i32, i32) {
    %c0_i32 = arith.constant 0 : i32
    %c0_i32_0 = arith.constant 0 : i32
    %c0_i32_1 = arith.constant 0 : i32
    return %c0_i32, %c0_i32_0 : i32, i32
  }
  func.func @transform_6(%arg0: i32) -> (i32, i32) {
    %c0_i32 = arith.constant 0 : i32
    %c0_i32_0 = arith.constant 0 : i32
    return %c0_i32, %arg0 : i32, i32
  }
}

</mosaic_0001>

<llo_original>
// kernel: residual_forward.5
$region0: #{residual_forward.5}
  #allocation0 [shape = 'u32[]', space=smem, size = 0x4, offset = 0x4, fixed_abs, tag = 'smem constant byte address 0x4 - core index']
  #allocation1 [shape = 'u32[144,128]{1,0:T(1,128)}', space=vmem, size = 0x12000, scoped, tag = 'internal scratch']
  %s0 = inlined_call_operand.vmem [shape: f32[8,32], index: 0, kind: input, shape index: {}]
  %s1 = inlined_call_operand.vmem [shape: f32[8,1], index: 1, kind: input, shape index: {}]
  %s2 = inlined_call_operand.vmem [shape: f32[8,1], index: 2, kind: input, shape index: {}]
  %s3 = inlined_call_operand.vmem [shape: f32[8,32], index: 3, kind: input, shape index: {}]
  %s4 = inlined_call_operand.vmem [shape: f32[8,1], index: 4, kind: input, shape index: {}]
  %s5 = inlined_call_operand.vmem [shape: f32[8,1], index: 5, kind: input, shape index: {}]
  %s6 = inlined_call_operand.vmem [shape: f32[8,32], index: 6, kind: output, shape index: {}]
  %s7 = sld [smem:[#allocation0]]
  $region34: #{residual_forward.5} parent=0
    _
  %s9 = ssub.s32 1, %s7
  %s10 = scalar_select 0, %s9, %s7
  // Predicated region
  $region2: #{residual_forward.5} parent=0 // pred_check
    _
  $region3: #{residual_forward.5} parent=0 // pred_check_branch
    %12 = sbr.rel (0) target = $region5
  $region4: #{residual_forward.5} parent=0 // pred_region
    _
  $region5: #{residual_forward.5} parent=0 // pred_fallthru
    _
  // Predicated region
  $region6: #{residual_forward.5} parent=0 // pred_check
    _
  $region7: #{residual_forward.5} parent=0 // pred_check_branch
    %14 = sbr.rel (0) target = $region9
  $region8: #{residual_forward.5} parent=0 // pred_region
    _
  $region9: #{residual_forward.5} parent=0 // pred_fallthru
    _
  // Predicated region
  $region10: #{residual_forward.5} parent=0 // pred_check
    _
  $region11: #{residual_forward.5} parent=0 // pred_check_branch
    %16 = sbr.rel (0) target = $region13
  $region12: #{residual_forward.5} parent=0 // pred_region
    _
  $region13: #{residual_forward.5} parent=0 // pred_fallthru
    _
  // Predicated region
  $region14: #{residual_forward.5} parent=0 // pred_check
    _
  $region15: #{residual_forward.5} parent=0 // pred_check_branch
    %18 = sbr.rel (0) target = $region17
  $region16: #{residual_forward.5} parent=0 // pred_region
    _
  $region17: #{residual_forward.5} parent=0 // pred_fallthru
    _
  // Predicated region
  $region18: #{residual_forward.5} parent=0 // pred_check
    _
  $region19: #{residual_forward.5} parent=0 // pred_check_branch
    %20 = sbr.rel (0) target = $region21
  $region20: #{residual_forward.5} parent=0 // pred_region
    _
  $region21: #{residual_forward.5} parent=0 // pred_fallthru
    _
  // Predicated region
  $region22: #{residual_forward.5} parent=0 // pred_check
    _
  $region23: #{residual_forward.5} parent=0 // pred_check_branch
    %22 = sbr.rel (0) target = $region25
  $region24: #{residual_forward.5} parent=0 // pred_region
    _
  $region25: #{residual_forward.5} parent=0 // pred_fallthru
    _
  %v23 = vld [vmem:[%s3] sm:$0xff]
  %v24 = vld [vmem:[%s4] sm:$0xff]
  %26 = vset.pattern.permute.xlu0 0
  %27 = vperm.xlu0 %26, %v24
  %v28 = vpop.permute.xlu0 %27
  %v30 = vmul.f32 %v23, %v28
  %v31 = vld [vmem:[%s5] sm:$0xff]
  %33 = vset.pattern.permute.xlu0 0
  %34 = vperm.xlu0 %33, %v31
  %v35 = vpop.permute.xlu0 %34
  %v37 = vadd.f32 %v30, %v35
  %v38 = vld [vmem:[%s0] sm:$0xff]
  %v39 = vld [vmem:[%s1] sm:$0xff]
  %41 = vset.pattern.permute.xlu0 0
  %42 = vperm.xlu0 %41, %v39
  %v43 = vpop.permute.xlu0 %42
  %v45 = vmul.f32 %v38, %v43
  %v46 = vld [vmem:[%s2] sm:$0xff]
  %48 = vset.pattern.permute.xlu0 0
  %49 = vperm.xlu0 %48, %v46
  %v50 = vpop.permute.xlu0 %49
  %v52 = vadd.f32 %v45, %v50
  %v53 = vadd.f32 %v52, %v37
  %v54 = vmax.f32 %v53, 0.0
  %vm55 = vcmask 261120
  %56 = vst.msk [vmem:[%s6] sm:$0xff] %vm55, %v54
  // Predicated region
  $region26: #{residual_forward.5} parent=0 // pred_check
    _
  $region27: #{residual_forward.5} parent=0 // pred_check_branch
    %58 = sbr.rel (0) target = $region29
  $region28: #{residual_forward.5} parent=0 // pred_region
    _
  $region29: #{residual_forward.5} parent=0 // pred_fallthru
    _
  // Predicated region
  $region30: #{residual_forward.5} parent=0 // pred_check
    _
  $region31: #{residual_forward.5} parent=0 // pred_check_branch
    %60 = sbr.rel (0) target = $region33
  $region32: #{residual_forward.5} parent=0 // pred_region
    _
  $region33: #{residual_forward.5} parent=0 // pred_fallthru
    _

// kernel: residual_forward.4
$region0: #{residual_forward.4}
  #allocation0 [shape = 'u32[]', space=smem, size = 0x4, offset = 0x4, fixed_abs, tag = 'smem constant byte address 0x4 - core index']
  #allocation1 [shape = 'u32[144,128]{1,0:T(1,128)}', space=vmem, size = 0x12000, scoped, tag = 'internal scratch']
  %s0 = inlined_call_operand.vmem [shape: f32[8,32], index: 0, kind: input, shape index: {}]
  %s1 = inlined_call_operand.vmem [shape: f32[8,1], index: 1, kind: input, shape index: {}]
  %s2 = inlined_call_operand.vmem [shape: f32[8,1], index: 2, kind: input, shape index: {}]
  %s3 = inlined_call_operand.vmem [shape: bf16[8,24], index: 3, kind: input, shape index: {}]
  %s4 = inlined_call_operand.vmem [shape: f32[8,32], index: 4, kind: output, shape index: {0}]
  %s5 = inlined_call_operand.vmem [shape: f32[8,1], index: 5, kind: output, shape index: {1}]
  %s6 = inlined_call_operand.vmem [shape: f32[8,1], index: 6, kind: output, shape index: {2}]
  %7 = xla_tuple %s4, %s5, %s6
  %s8 = sld [smem:[#allocation0]]
  $region46: #{residual_forward.4} parent=0
    _
  %s10 = ssub.s32 1, %s8
  %s11 = scalar_select 0, %s10, %s8
  // Predicated region
  $region2: #{residual_forward.4} parent=0 // pred_check
    _
  $region3: #{residual_forward.4} parent=0 // pred_check_branch
    %13 = sbr.rel (0) target = $region5
  $region4: #{residual_forward.4} parent=0 // pred_region
    _
  $region5: #{residual_forward.4} parent=0 // pred_fallthru
    _
  // Predicated region
  $region6: #{residual_forward.4} parent=0 // pred_check
    _
  $region7: #{residual_forward.4} parent=0 // pred_check_branch
    %15 = sbr.rel (0) target = $region9
  $region8: #{residual_forward.4} parent=0 // pred_region
    _
  $region9: #{residual_forward.4} parent=0 // pred_fallthru
    _
  // Predicated region
  $region10: #{residual_forward.4} parent=0 // pred_check
    _
  $region11: #{residual_forward.4} parent=0 // pred_check_branch
    %17 = sbr.rel (0) target = $region13
  $region12: #{residual_forward.4} parent=0 // pred_region
    _
  $region13: #{residual_forward.4} parent=0 // pred_fallthru
    _
  // Predicated region
  $region14: #{residual_forward.4} parent=0 // pred_check
    _
  $region15: #{residual_forward.4} parent=0 // pred_check_branch
    %19 = sbr.rel (0) target = $region17
  $region16: #{residual_forward.4} parent=0 // pred_region
    _
  $region17: #{residual_forward.4} parent=0 // pred_fallthru
    _
  %p21 = scmp.eq.s32.totalorder 0, 0
  // Predicated region
  $region18: #{residual_forward.4} parent=0 // pred_check
    %p22 = pneg %p21
  $region19: #{residual_forward.4} parent=0 // pred_check_branch
    %24 = sbr.rel (%p22) target = $region21
  $region20: #{residual_forward.4} parent=0 // pred_region
    %vm25 = vcmask 7168
    %26 = vst.msk [vmem:[%s5] sm:$0xff] %vm25, 0.0
    %27 = vst.msk [vmem:[%s6] sm:$0xff] %vm25, 0.0
  $region21: #{residual_forward.4} parent=0 // pred_fallthru
    _
  %v28 = vld [vmem:[%s0] sm:$0xff]
  %v29 = vld [vmem:[%s1] sm:$0xff]
  %31 = vset.pattern.permute.xlu0 0
  %32 = vperm.xlu0 %31, %v29
  %v33 = vpop.permute.xlu0 %32
  %v35 = vmul.f32 %v28, %v33
  %v36 = vld [vmem:[%s2] sm:$0xff]
  %38 = vset.pattern.permute.xlu0 0
  %39 = vperm.xlu0 %38, %v36
  %v40 = vpop.permute.xlu0 %39
  %v42 = vadd.f32 %v35, %v40
  %v43 = vmax.f32 %v42, 0.0
  %v44 = vlaneseq
  %v45 = vand.u32 %v44, 127
  %vm46 = vcmp.lt.s32.totalorder %v45, 0
  %v47 = vsub.s32 0, %v45
  %v48 = vsel %vm46, %v47, %v45
  %v49 = vshrl.u32 %v48, 4
  %v50 = vand.u32 %v48, 15
  %v51 = vsub.s32 0, %v50
  %v52 = vsel %vm46, %v51, %v50
  %vm53 = vcmp.ne.s32.totalorder %v52, 0
  %vm54 = vcmp.lt.s32.totalorder %v52, 0
  %vm55 = vmand %vm54, %vm53
  %v56 = vadd.s32 %v52, 16
  %v57 = vsel %vm55, %v56, %v52
  %vm58 = vcmp.ne.s32.totalorder %v57, 0
  %vm59 = vcmp.ne.s32.totalorder %v57, 15
  %61 = vrot.lane.b32.xlu0 %v43, 1
  %v62 = vpop.permute.xlu0 %61
  %vm64 = vcmask 7168
  %v65 = vsel %vm64, 0.0, %v62
  %v66 = vsel %vm58, 1, 0
  %vm67 = vcmp.eq.s32.totalorder %v66, 1
  %v68 = vsel %vm67, %v65, 0.0
  %69 = vrot.lane.b32.xlu0 %v43, 127
  %v70 = vpop.permute.xlu0 %69
  %vm72 = vcmask 252928
  %v73 = vsel %vm72, %v70, 0.0
  %v74 = vsel %vm59, 1, 0
  %vm75 = vcmp.eq.s32.totalorder %v74, 1
  %v76 = vsel %vm75, %v73, 0.0
  %v77 = vpack.c.bf16 %v43, %v68
  %v78 = vpack.c.bf16 %v76, %v76
  %v79 = vld [vmem:[%s3] sm:$0xf]
  %vm80 = vcmask 195584
  %v82 = vsel %vm80, %v79, 0
  %vm84 = vcmask 1043456
  %v86 = vsel %vm84, %v78, 0
  %88 = vmatprep.subr.bf16.mxu0 0
  %89 = vmatpush1.bf16.msra.mxu0 0
  %90 = vmatprep.subr.bf16.mxu0 0
  %91 = vmatpush1.bf16.msra.mxu0 0
  %92 = vmatprep.subr.bf16.mxu0 0
  %93 = vmatpush1.bf16.msra.mxu0 0
  %94 = vmatprep.subr.bf16.mxu0 0
  %95 = vmatpush1.bf16.msra.mxu0 0
  %96 = vmatprep.subr.bf16.mxu0 0
  %97 = vmatpush1.bf16.msra.mxu0 0
  %98 = vmatprep.subr.bf16.mxu0 0
  %99 = vmatpush1.bf16.msra.mxu0 0
  %100 = vmatprep.subr.bf16.mxu0 0
  %101 = vmatpush1.bf16.msra.mxu0 %v86
  %102 = vmatprep.subr.bf16.mxu0 0
  %103 = vmatpush1.bf16.msra.mxu0 %v77
  %104 = vmatprep.subr.bf16.mxu0 0
  %105 = vmatpush2.bf16.msra.mxu0 0
  %106 = vmatprep.subr.bf16.mxu0 0
  %107 = vmatpush2.bf16.msra.mxu0 0
  %108 = vmatprep.subr.bf16.mxu0 0
  %109 = vmatpush2.bf16.msra.mxu0 0
  %110 = vmatprep.subr.bf16.mxu0 0
  %111 = vmatpush2.bf16.msra.mxu0 0
  %112 = vmatprep.subr.bf16.mxu0 0
  %113 = vmatpush2.bf16.msra.mxu0 0
  %114 = vmatprep.subr.bf16.mxu0 0
  %115 = vmatpush2.bf16.msra.mxu0 0
  %116 = vmatprep.subr.bf16.mxu0 0
  %117 = vmatpush2.bf16.msra.mxu0 0
  %118 = vmatprep.subr.bf16.mxu0 0
  %119 = vmatpush2.bf16.msra.mxu0 0
  %120 = vmatprep.mubr.bf16.mxu0 0
  %121 = vmatmul.mubr.bf16.gmra.mxu0 %v82
  %v122 = vpop.f32.mrf.mxu0
  %v123 = vadd.f32 0.0, %v122
  %v124 = vpop.f32.mrf.mxu0
  %v125 = vpop.f32.mrf.mxu0
  %v126 = vpop.f32.mrf.mxu0
  %127 = vdwg.mxu0
  %vm128 = vcmask 261120
  %129 = vst.msk [vmem:[%s4] sm:$0xff] %vm128, %v123
  %v130 = vld [vmem:[%s5] sm:$0xff]
  %v131 = vsel %vm128, %v123, 0.0
  %132 = vadd.xlane.f32.xlu0 %v131
  %v133 = vpop.xlane.xlu0 %132
  %v134 = vadd.f32 %v130, %v133
  %135 = vst.msk [vmem:[%s5] sm:$0xff] %vm64, %v134
  %v136 = vld [vmem:[%s6] sm:$0xff]
  %v137 = vmul.f32 %v123, %v123
  %v138 = vsel %vm128, %v137, 0.0
  %139 = vadd.xlane.f32.xlu0 %v138
  %v140 = vpop.xlane.xlu0 %139
  %v141 = vadd.f32 %v136, %v140
  %142 = vst.msk [vmem:[%s6] sm:$0xff] %vm64, %v141
  // Predicated region
  $region22: #{residual_forward.4} parent=0 // pred_check
    _
  $region23: #{residual_forward.4} parent=0 // pred_check_branch
    %144 = sbr.rel (0) target = $region25
  $region24: #{residual_forward.4} parent=0 // pred_region
    _
  $region25: #{residual_forward.4} parent=0 // pred_fallthru
    _
  // Predicated region
  $region26: #{residual_forward.4} parent=0 // pred_check
    _
  $region27: #{residual_forward.4} parent=0 // pred_check_branch
    %146 = sbr.rel (0) target = $region29
  $region28: #{residual_forward.4} parent=0 // pred_region
    _
  $region29: #{residual_forward.4} parent=0 // pred_fallthru
    _
  // Predicated region
  $region30: #{residual_forward.4} parent=0 // pred_check
    _
  $region31: #{residual_forward.4} parent=0 // pred_check_branch
    %148 = sbr.rel (0) target = $region33
  $region32: #{residual_forward.4} parent=0 // pred_region
    _
  $region33: #{residual_forward.4} parent=0 // pred_fallthru
    _
  // Predicated region
  $region34: #{residual_forward.4} parent=0 // pred_check
    _
  $region35: #{residual_forward.4} parent=0 // pred_check_branch
    %150 = sbr.rel (0) target = $region37
  $region36: #{residual_forward.4} parent=0 // pred_region
    _
  $region37: #{residual_forward.4} parent=0 // pred_fallthru
    _
  // Predicated region
  $region38: #{residual_forward.4} parent=0 // pred_check
    _
  $region39: #{residual_forward.4} parent=0 // pred_check_branch
    %152 = sbr.rel (0) target = $region41
  $region40: #{residual_forward.4} parent=0 // pred_region
    _
  $region41: #{residual_forward.4} parent=0 // pred_fallthru
    _
  // Predicated region
  $region42: #{residual_forward.4} parent=0 // pred_check
    _
  $region43: #{residual_forward.4} parent=0 // pred_check_branch
    %154 = sbr.rel (0) target = $region45
  $region44: #{residual_forward.4} parent=0 // pred_region
    _
  $region45: #{residual_forward.4} parent=0 // pred_fallthru
    _

// kernel: residual_forward.3
$region0: #{residual_forward.3}
  #allocation0 [shape = 'u32[]', space=smem, size = 0x4, offset = 0x4, fixed_abs, tag = 'smem constant byte address 0x4 - core index']
  #allocation1 [shape = 'u32[144,128]{1,0:T(1,128)}', space=vmem, size = 0x12000, scoped, tag = 'internal scratch']
  %s0 = inlined_call_operand.vmem [shape: f32[8,32], index: 0, kind: input, shape index: {}]
  %s1 = inlined_call_operand.vmem [shape: bf16[8,24], index: 1, kind: input, shape index: {}]
  %s2 = inlined_call_operand.vmem [shape: bf16[8,8], index: 2, kind: input, shape index: {}]
  %s3 = inlined_call_operand.vmem [shape: f32[8,32], index: 3, kind: output, shape index: {0}]
  %s4 = inlined_call_operand.vmem [shape: f32[8,1], index: 4, kind: output, shape index: {1}]
  %s5 = inlined_call_operand.vmem [shape: f32[8,1], index: 5, kind: output, shape index: {2}]
  %s6 = inlined_call_operand.vmem [shape: f32[8,32], index: 6, kind: output, shape index: {3}]
  %s7 = inlined_call_operand.vmem [shape: f32[8,1], index: 7, kind: output, shape index: {4}]
  %s8 = inlined_call_operand.vmem [shape: f32[8,1], index: 8, kind: output, shape index: {5}]
  %9 = xla_tuple %s3, %s4, %s5, %s6, %s7, %s8
  %s10 = sld [smem:[#allocation0]]
  $region66: #{residual_forward.3} parent=0
    _
  %s12 = ssub.s32 1, %s10
  %s13 = scalar_select 0, %s12, %s10
  // Predicated region
  $region2: #{residual_forward.3} parent=0 // pred_check
    _
  $region3: #{residual_forward.3} parent=0 // pred_check_branch
    %15 = sbr.rel (0) target = $region5
  $region4: #{residual_forward.3} parent=0 // pred_region
    _
  $region5: #{residual_forward.3} parent=0 // pred_fallthru
    _
  // Predicated region
  $region6: #{residual_forward.3} parent=0 // pred_check
    _
  $region7: #{residual_forward.3} parent=0 // pred_check_branch
    %17 = sbr.rel (0) target = $region9
  $region8: #{residual_forward.3} parent=0 // pred_region
    _
  $region9: #{residual_forward.3} parent=0 // pred_fallthru
    _
  // Predicated region
  $region10: #{residual_forward.3} parent=0 // pred_check
    _
  $region11: #{residual_forward.3} parent=0 // pred_check_branch
    %19 = sbr.rel (0) target = $region13
  $region12: #{residual_forward.3} parent=0 // pred_region
    _
  $region13: #{residual_forward.3} parent=0 // pred_fallthru
    _
  %p21 = scmp.eq.s32.totalorder 0, 0
  // Predicated region
  $region14: #{residual_forward.3} parent=0 // pred_check
    %p22 = pneg %p21
  $region15: #{residual_forward.3} parent=0 // pred_check_branch
    %24 = sbr.rel (%p22) target = $region17
  $region16: #{residual_forward.3} parent=0 // pred_region
    %vm25 = vcmask 7168
    %26 = vst.msk [vmem:[%s4] sm:$0xff] %vm25, 0.0
    %27 = vst.msk [vmem:[%s5] sm:$0xff] %vm25, 0.0
    %28 = vst.msk [vmem:[%s7] sm:$0xff] %vm25, 0.0
    %29 = vst.msk [vmem:[%s8] sm:$0xff] %vm25, 0.0
  $region17: #{residual_forward.3} parent=0 // pred_fallthru
    _
  %v30 = vld [vmem:[%s0] sm:$0xff]
  %v31 = vlaneseq
  %v32 = vand.u32 %v31, 127
  %vm33 = vcmp.lt.s32.totalorder %v32, 0
  %v34 = vsub.s32 0, %v32
  %v35 = vsel %vm33, %v34, %v32
  %v36 = vshrl.u32 %v35, 4
  %v37 = vand.u32 %v35, 15
  %v38 = vsub.s32 0, %v37
  %v39 = vsel %vm33, %v38, %v37
  %vm40 = vcmp.ne.s32.totalorder %v39, 0
  %vm41 = vcmp.lt.s32.totalorder %v39, 0
  %vm42 = vmand %vm41, %vm40
  %v43 = vadd.s32 %v39, 16
  %v44 = vsel %vm42, %v43, %v39
  %vm45 = vcmp.ne.s32.totalorder %v44, 0
  %vm46 = vcmp.ne.s32.totalorder %v44, 15
  %48 = vrot.lane.b32.xlu0 %v30, 1
  %v49 = vpop.permute.xlu0 %48
  %vm51 = vcmask 7168
  %v52 = vsel %vm51, 0.0, %v49
  %v53 = vsel %vm45, 1, 0
  %vm54 = vcmp.eq.s32.totalorder %v53, 1
  %v55 = vsel %vm54, %v52, 0.0
  %56 = vrot.lane.b32.xlu0 %v30, 127
  %v57 = vpop.permute.xlu0 %56
  %vm59 = vcmask 252928
  %v60 = vsel %vm59, %v57, 0.0
  %v61 = vsel %vm46, 1, 0
  %vm62 = vcmp.eq.s32.totalorder %v61, 1
  %v63 = vsel %vm62, %v60, 0.0
  %v64 = vpack.c.bf16 %v30, %v55
  %v65 = vpack.c.bf16 %v63, %v63
  %v66 = vpack.c.bf16 %v30, %v30
  %v67 = vld [vmem:[%s1] sm:$0xf]
  %vm68 = vcmask 195584
  %v70 = vsel %vm68, %v67, 0
  %vm72 = vcmask 1043456
  %v74 = vsel %vm72, %v65, 0
  %76 = vmatprep.subr.bf16.mxu0 0
  %77 = vmatpush1.bf16.msra.mxu0 0
  %78 = vmatprep.subr.bf16.mxu0 0
  %79 = vmatpush1.bf16.msra.mxu0 0
  %80 = vmatprep.subr.bf16.mxu0 0
  %81 = vmatpush1.bf16.msra.mxu0 0
  %82 = vmatprep.subr.bf16.mxu0 0
  %83 = vmatpush1.bf16.msra.mxu0 0
  %84 = vmatprep.subr.bf16.mxu0 0
  %85 = vmatpush1.bf16.msra.mxu0 0
  %86 = vmatprep.subr.bf16.mxu0 0
  %87 = vmatpush1.bf16.msra.mxu0 0
  %88 = vmatprep.subr.bf16.mxu0 0
  %89 = vmatpush1.bf16.msra.mxu0 %v74
  %90 = vmatprep.subr.bf16.mxu0 0
  %91 = vmatpush1.bf16.msra.mxu0 %v64
  %92 = vmatprep.subr.bf16.mxu0 0
  %93 = vmatpush2.bf16.msra.mxu0 0
  %94 = vmatprep.subr.bf16.mxu0 0
  %95 = vmatpush2.bf16.msra.mxu0 0
  %96 = vmatprep.subr.bf16.mxu0 0
  %97 = vmatpush2.bf16.msra.mxu0 0
  %98 = vmatprep.subr.bf16.mxu0 0
  %99 = vmatpush2.bf16.msra.mxu0 0
  %100 = vmatprep.subr.bf16.mxu0 0
  %101 = vmatpush2.bf16.msra.mxu0 0
  %102 = vmatprep.subr.bf16.mxu0 0
  %103 = vmatpush2.bf16.msra.mxu0 0
  %104 = vmatprep.subr.bf16.mxu0 0
  %105 = vmatpush2.bf16.msra.mxu0 0
  %106 = vmatprep.subr.bf16.mxu0 0
  %107 = vmatpush2.bf16.msra.mxu0 0
  %108 = vmatprep.mubr.bf16.mxu0 0
  %109 = vmatmul.mubr.bf16.gmra.mxu0 %v70
  %v110 = vpop.f32.mrf.mxu0
  %v111 = vadd.f32 0.0, %v110
  %v112 = vpop.f32.mrf.mxu0
  %v113 = vpop.f32.mrf.mxu0
  %v114 = vpop.f32.mrf.mxu0
  %115 = vdwg.mxu0
  %vm116 = vcmask 261120
  %117 = vst.msk [vmem:[%s3] sm:$0xff] %vm116, %v111
  %v118 = vld [vmem:[%s4] sm:$0xff]
  %v119 = vsel %vm116, %v111, 0.0
  %120 = vadd.xlane.f32.xlu0 %v119
  %v121 = vpop.xlane.xlu0 %120
  %v122 = vadd.f32 %v118, %v121
  %123 = vst.msk [vmem:[%s4] sm:$0xff] %vm51, %v122
  %v124 = vld [vmem:[%s5] sm:$0xff]
  %v125 = vmul.f32 %v111, %v111
  %v126 = vsel %vm116, %v125, 0.0
  %127 = vadd.xlane.f32.xlu0 %v126
  %v128 = vpop.xlane.xlu0 %127
  %v129 = vadd.f32 %v124, %v128
  %130 = vst.msk [vmem:[%s5] sm:$0xff] %vm51, %v129
  %v131 = vld [vmem:[%s2] sm:$0xf]
  %vm132 = vcmask 64512
  %v134 = vsel %vm132, %v131, 0
  %v137 = vsel %vm72, %v66, 0
  %139 = vmatprep.subr.bf16.mxu0 0
  %140 = vmatpush1.bf16.msra.mxu0 0
  %141 = vmatprep.subr.bf16.mxu0 0
  %142 = vmatpush1.bf16.msra.mxu0 0
  %143 = vmatprep.subr.bf16.mxu0 0
  %144 = vmatpush1.bf16.msra.mxu0 0
  %145 = vmatprep.subr.bf16.mxu0 0
  %146 = vmatpush1.bf16.msra.mxu0 0
  %147 = vmatprep.subr.bf16.mxu0 0
  %148 = vmatpush1.bf16.msra.mxu0 0
  %149 = vmatprep.subr.bf16.mxu0 0
  %150 = vmatpush1.bf16.msra.mxu0 0
  %151 = vmatprep.subr.bf16.mxu0 0
  %152 = vmatpush1.bf16.msra.mxu0 0
  %153 = vmatprep.subr.bf16.mxu0 0
  %154 = vmatpush1.bf16.msra.mxu0 %v137
  %155 = vmatprep.subr.bf16.mxu0 0
  %156 = vmatpush2.bf16.msra.mxu0 0
  %157 = vmatprep.subr.bf16.mxu0 0
  %158 = vmatpush2.bf16.msra.mxu0 0
  %159 = vmatprep.subr.bf16.mxu0 0
  %160 = vmatpush2.bf16.msra.mxu0 0
  %161 = vmatprep.subr.bf16.mxu0 0
  %162 = vmatpush2.bf16.msra.mxu0 0
  %163 = vmatprep.subr.bf16.mxu0 0
  %164 = vmatpush2.bf16.msra.mxu0 0
  %165 = vmatprep.subr.bf16.mxu0 0
  %166 = vmatpush2.bf16.msra.mxu0 0
  %167 = vmatprep.subr.bf16.mxu0 0
  %168 = vmatpush2.bf16.msra.mxu0 0
  %169 = vmatprep.subr.bf16.mxu0 0
  %170 = vmatpush2.bf16.msra.mxu0 0
  %171 = vmatprep.mubr.bf16.mxu0 0
  %172 = vmatmul.mubr.bf16.gmra.mxu0 %v134
  %v173 = vpop.f32.mrf.mxu0
  %v174 = vadd.f32 0.0, %v173
  %v175 = vpop.f32.mrf.mxu0
  %v176 = vpop.f32.mrf.mxu0
  %v177 = vpop.f32.mrf.mxu0
  %178 = vdwg.mxu0
  %179 = vst.msk [vmem:[%s6] sm:$0xff] %vm116, %v174
  %v180 = vld [vmem:[%s7] sm:$0xff]
  %v181 = vsel %vm116, %v174, 0.0
  %182 = vadd.xlane.f32.xlu0 %v181
  %v183 = vpop.xlane.xlu0 %182
  %v184 = vadd.f32 %v180, %v183
  %185 = vst.msk [vmem:[%s7] sm:$0xff] %vm51, %v184
  %v186 = vld [vmem:[%s8] sm:$0xff]
  %v187 = vmul.f32 %v174, %v174
  %v188 = vsel %vm116, %v187, 0.0
  %189 = vadd.xlane.f32.xlu0 %v188
  %v190 = vpop.xlane.xlu0 %189
  %v191 = vadd.f32 %v186, %v190
  %192 = vst.msk [vmem:[%s8] sm:$0xff] %vm51, %v191
  // Predicated region
  $region18: #{residual_forward.3} parent=0 // pred_check
    _
  $region19: #{residual_forward.3} parent=0 // pred_check_branch
    %194 = sbr.rel (0) target = $region21
  $region20: #{residual_forward.3} parent=0 // pred_region
    _
  $region21: #{residual_forward.3} parent=0 // pred_fallthru
    _
  // Predicated region
  $region22: #{residual_forward.3} parent=0 // pred_check
    _
  $region23: #{residual_forward.3} parent=0 // pred_check_branch
    %196 = sbr.rel (0) target = $region25
  $region24: #{residual_forward.3} parent=0 // pred_region
    _
  $region25: #{residual_forward.3} parent=0 // pred_fallthru
    _
  // Predicated region
  $region26: #{residual_forward.3} parent=0 // pred_check
    _
  $region27: #{residual_forward.3} parent=0 // pred_check_branch
    %198 = sbr.rel (0) target = $region29
  $region28: #{residual_forward.3} parent=0 // pred_region
    _
  $region29: #{residual_forward.3} parent=0 // pred_fallthru
    _
  // Predicated region
  $region30: #{residual_forward.3} parent=0 // pred_check
    _
  $region31: #{residual_forward.3} parent=0 // pred_check_branch
    %200 = sbr.rel (0) target = $region33
  $region32: #{residual_forward.3} parent=0 // pred_region
    _
  $region33: #{residual_forward.3} parent=0 // pred_fallthru
    _
  // Predicated region
  $region34: #{residual_forward.3} parent=0 // pred_check
    _
  $region35: #{residual_forward.3} parent=0 // pred_check_branch
    %202 = sbr.rel (0) target = $region37
  $region36: #{residual_forward.3} parent=0 // pred_region
    _
  $region37: #{residual_forward.3} parent=0 // pred_fallthru
    _
  // Predicated region
  $region38: #{residual_forward.3} parent=0 // pred_check
    _
  $region39: #{residual_forward.3} parent=0 // pred_check_branch
    %204 = sbr.rel (0) target = $region41
  $region40: #{residual_forward.3} parent=0 // pred_region
    _
  $region41: #{residual_forward.3} parent=0 // pred_fallthru
    _
  // Predicated region
  $region42: #{residual_forward.3} parent=0 // pred_check
    _
  $region43: #{residual_forward.3} parent=0 // pred_check_branch
    %206 = sbr.rel (0) target = $region45
  $region44: #{residual_forward.3} parent=0 // pred_region
    _
  $region45: #{residual_forward.3} parent=0 // pred_fallthru
    _
  // Predicated region
  $region46: #{residual_forward.3} parent=0 // pred_check
    _
  $region47: #{residual_forward.3} parent=0 // pred_check_branch
    %208 = sbr.rel (0) target = $region49
  $region48: #{residual_forward.3} parent=0 // pred_region
    _
  $region49: #{residual_forward.3} parent=0 // pred_fallthru
    _
  // Predicated region
  $region50: #{residual_forward.3} parent=0 // pred_check
    _
  $region51: #{residual_forward.3} parent=0 // pred_check_branch
    %210 = sbr.rel (0) target = $region53
  $region52: #{residual_forward.3} parent=0 // pred_region
    _
  $region53: #{residual_forward.3} parent=0 // pred_fallthru
    _
  // Predicated region
  $region54: #{residual_forward.3} parent=0 // pred_check
    _
  $region55: #{residual_forward.3} parent=0 // pred_check_branch
    %212 = sbr.rel (0) target = $region57
  $region56: #{residual_forward.3} parent=0 // pred_region
    _
  $region57: #{residual_forward.3} parent=0 // pred_fallthru
    _
  // Predicated region
  $region58: #{residual_forward.3} parent=0 // pred_check
    _
  $region59: #{residual_forward.3} parent=0 // pred_check_branch
    %214 = sbr.rel (0) target = $region61
  $region60: #{residual_forward.3} parent=0 // pred_region
    _
  $region61: #{residual_forward.3} parent=0 // pred_fallthru
    _
  // Predicated region
  $region62: #{residual_forward.3} parent=0 // pred_check
    _
  $region63: #{residual_forward.3} parent=0 // pred_check_branch
    %216 = sbr.rel (0) target = $region65
  $region64: #{residual_forward.3} parent=0 // pred_region
    _
  $region65: #{residual_forward.3} parent=0 // pred_fallthru
    _

</llo_original>
